<compile_context>
chip_gen: v5e
topology: v5e:2x2
jax: 0.10.0
libtpu: 0.0.40
codegen_flags: <defaults>
</compile_context>

<pallas_src>
import functools

import jax
import jax.numpy as jnp
from jax.experimental import pallas as pl
from jax.experimental.pallas import tpu as pltpu


def _round_up(x: int, m: int) -> int:
    return ((x + m - 1) // m) * m


def _wce_kernel(w_ref, logits_ref, targets_ref, out_ref, acc_ref, *, inv_count):
    # w_ref:       (1,  Dp)  per-position weights (resident across grid steps)
    # logits_ref:  (TB, Dp)  row tile of logits
    # targets_ref: (TB, Dp)  row tile of targets
    # out_ref:     (1, 1)    scalar loss (resident accumulator output)
    # acc_ref:     (1, 1)    VMEM scratch accumulator
    i = pl.program_id(0)

    @pl.when(i == 0)
    def _():
        acc_ref[...] = jnp.zeros_like(acc_ref)

    lg = logits_ref[...].astype(jnp.float32)
    z = targets_ref[...].astype(jnp.float32)
    q = w_ref[...].astype(jnp.float32)            # (1, Dp) broadcasts over rows

    x = jax.nn.sigmoid(lg)
    loss = q * z * (-jnp.log(x)) + (1.0 - z) * (-jnp.log(1.0 - x))

    acc_ref[...] = acc_ref[...] + jnp.sum(loss)

    @pl.when(i == pl.num_programs(0) - 1)
    def _():
        out_ref[...] = acc_ref[...] * inv_count


def weighted_ce_with_logits(logits: jax.Array,
                            targets: jax.Array,
                            pos_weight: jax.Array,
                            *,
                            block_rows: int = 128) -> jax.Array:
    """Pallas equivalent of WeightedCrossEntropyWithLogits(pos_weight)(logits, targets)."""
    assert logits.ndim == 2, "expects (batch, dim) logits"
    assert logits.shape == targets.shape
    b, d = logits.shape
    assert pos_weight.shape == (d,)

    # Lane-dense / sublane-aligned padded shapes.
    d_pad = _round_up(d, 128)
    tb = min(_round_up(block_rows, 8), _round_up(b, 8))
    b_pad = _round_up(b, tb)

    # Pad logits with a large-negative value and targets with 0 so that padded
    # elements contribute exactly 0 to the loss in f32 (sigmoid(-30) underflows,
    # 1 - sigmoid(-30) == 1.0, and the z-weighted term is multiplied by z == 0).
    PAD_LOGIT = -30.0
    lg = jnp.pad(
        logits.astype(jnp.float32),
        ((0, b_pad - b), (0, d_pad - d)),
        constant_values=PAD_LOGIT,
    )
    tg = jnp.pad(targets.astype(jnp.float32), ((0, b_pad - b), (0, d_pad - d)))
    w = jnp.pad(pos_weight.astype(jnp.float32), (0, d_pad - d)).reshape(1, d_pad)

    inv_count = 1.0 / float(b * d)
    kernel = functools.partial(_wce_kernel, inv_count=inv_count)

    out = pl.pallas_call(
        kernel,
        out_shape=jax.ShapeDtypeStruct((1, 1), jnp.float32),
        grid=(b_pad // tb,),
        in_specs=[
            pl.BlockSpec((1, d_pad), lambda i: (0, 0)),     # pos_weight (resident)
            pl.BlockSpec((tb, d_pad), lambda i: (i, 0)),    # logits row tile
            pl.BlockSpec((tb, d_pad), lambda i: (i, 0)),    # targets row tile
        ],
        out_specs=pl.BlockSpec((1, 1), lambda i: (0, 0)),
        scratch_shapes=[pltpu.VMEM((1, 1), jnp.float32)],
        compiler_params=pltpu.CompilerParams(
            dimension_semantics=("arbitrary",),  # reduction axis: output resident
        ),
    )(w, lg, tg)

    return out[0, 0]


if __name__ == "__main__":
    key = jax.random.PRNGKey(0)
    k1, k2, k3 = jax.random.split(key, 3)

    B, D = 16, 96  # small demo shapes; padded internally to (16, 128), row tile 8

    logits = jax.random.normal(k1, (B, D), dtype=jnp.float32)
    targets = (jax.random.uniform(k2, (B, D)) < 0.5).astype(jnp.float32)
    pos_weight = jax.random.uniform(k3, (D,), minval=0.5, maxval=2.0,
                                    dtype=jnp.float32)

    loss = weighted_ce_with_logits(logits, targets, pos_weight, block_rows=8)
    loss = jax.block_until_ready(loss)

    # Plain-JAX reference (same formula as the PyTorch module).
    q = jnp.broadcast_to(pos_weight[None, :], logits.shape)
    x = jax.nn.sigmoid(logits)
    L = q * targets * (-jnp.log(x)) + (1.0 - targets) * (-jnp.log(1.0 - x))
    ref = jnp.mean(L)  # mean(mean(L)) == global mean

    assert loss.shape == (), loss.shape
    assert jnp.isfinite(loss), loss
    assert jnp.allclose(loss, ref, rtol=1e-5, atol=1e-6), (loss, ref)

    print("KERNEL_OK")
</pallas_src>

<mosaic_0001>
module attributes {stable_mosaic.version = 11 : i64} {
  func.func @_wce_kernel(%arg0: i32, %arg1: memref<1x128xf32, #tpu.memory_space<vmem>>, %arg2: memref<8x128xf32, #tpu.memory_space<vmem>>, %arg3: memref<8x128xf32, #tpu.memory_space<vmem>>, %arg4: memref<1x1xf32, #tpu.memory_space<vmem>>, %arg5: memref<1x1xf32, #tpu.memory_space<vmem>>) attributes {dimension_semantics = [#tpu.dimension_semantics<arbitrary>], iteration_bounds = array<i64: 2>, scalar_prefetch = 0 : i64, scratch_operands = 1 : i64, tpu.core_type = #tpu.core_type<tc>, window_params = [{pipeline_mode = #tpu.pipeline_mode<synchronous>, transform_indices = @transform_0, window_bounds = array<i64: 1, 128>}, {transform_indices = @transform_1, window_bounds = array<i64: 8, 128>}, {transform_indices = @transform_2, window_bounds = array<i64: 8, 128>}, {pipeline_mode = #tpu.pipeline_mode<synchronous>, transform_indices = @transform_3, window_bounds = array<i64: 1, 1>}]} {
    %c0_i32 = arith.constant 0 : i32
    %0 = arith.cmpi eq, %arg0, %c0_i32 : i32
    %1 = arith.extui %0 : i1 to i32
    %c0_i32_0 = arith.constant 0 : i32
    %2 = arith.cmpi ne, %1, %c0_i32_0 : i32
    scf.if %2 {
      %cst_16 = arith.constant 0.000000e+00 : f32
      %37 = vector.broadcast %cst_16 : f32 to vector<1x1xf32>
      %c0_17 = arith.constant 0 : index
      %c0_18 = arith.constant 0 : index
      %38 = vector.load %arg5[%c0_17, %c0_18] : memref<1x1xf32, #tpu.memory_space<vmem>>, vector<1x1xf32>
      tpu.vector_store %arg5[%c0_17, %c0_18], %37 {strides = array<i32>} : memref<1x1xf32, #tpu.memory_space<vmem>>, vector<1x1xf32>,
    } else {
    }
    %c0 = arith.constant 0 : index
    %c0_1 = arith.constant 0 : index
    %3 = vector.load %arg2[%c0, %c0_1] : memref<8x128xf32, #tpu.memory_space<vmem>>, vector<8x128xf32>
    %c0_2 = arith.constant 0 : index
    %c0_3 = arith.constant 0 : index
    %4 = vector.load %arg3[%c0_2, %c0_3] : memref<8x128xf32, #tpu.memory_space<vmem>>, vector<8x128xf32>
    %c0_4 = arith.constant 0 : index
    %c0_5 = arith.constant 0 : index
    %5 = vector.load %arg1[%c0_4, %c0_5] : memref<1x128xf32, #tpu.memory_space<vmem>>, vector<1x128xf32>
    %6 = arith.negf %3 : vector<8x128xf32>
    %7 = math.exp %6 : vector<8x128xf32>
    %cst = arith.constant 1.000000e+00 : f32
    %8 = vector.broadcast %cst : f32 to vector<8x128xf32>
    %9 = arith.addf %8, %7 : vector<8x128xf32>
    %10 = arith.divf %8, %9 : vector<8x128xf32>
    %11 = vector.broadcast %5 : vector<1x128xf32> to vector<8x128xf32>
    %12 = arith.mulf %11, %4 : vector<8x128xf32>
    %13 = math.log %10 : vector<8x128xf32>
    %cst_6 = arith.constant 0.000000e+00 : f32
    %14 = vector.broadcast %cst_6 : f32 to vector<8x128xf32>
    %15 = arith.subf %14, %13 : vector<8x128xf32>
    %16 = arith.mulf %12, %15 : vector<8x128xf32>
    %cst_7 = arith.constant 1.000000e+00 : f32
    %17 = vector.broadcast %cst_7 : f32 to vector<8x128xf32>
    %18 = arith.subf %17, %4 : vector<8x128xf32>
    %cst_8 = arith.constant 1.000000e+00 : f32
    %19 = vector.broadcast %cst_8 : f32 to vector<8x128xf32>
    %20 = arith.subf %19, %10 : vector<8x128xf32>
    %21 = math.log %20 : vector<8x128xf32>
    %cst_9 = arith.constant 0.000000e+00 : f32
    %22 = vector.broadcast %cst_9 : f32 to vector<8x128xf32>
    %23 = arith.subf %22, %21 : vector<8x128xf32>
    %24 = arith.mulf %18, %23 : vector<8x128xf32>
    %25 = arith.addf %16, %24 : vector<8x128xf32>
    %c0_10 = arith.constant 0 : index
    %c0_11 = arith.constant 0 : index
    %26 = vector.load %arg5[%c0_10, %c0_11] : memref<1x1xf32, #tpu.memory_space<vmem>>, vector<1x1xf32>
    %27 = vector.shape_cast %25 : vector<8x128xf32> to vector<1x8x128xf32>
    %cst_12 = arith.constant dense<0.000000e+00> : vector<1xf32>
    %28 = vector.multi_reduction <add>, %27, %cst_12 [1, 2] : vector<1x8x128xf32> to vector<1xf32>
    %29 = vector.shape_cast %28 : vector<1xf32> to vector<1x1x1xf32>
    %30 = vector.extract %29[0, 0, 0] : f32 from vector<1x1x1xf32>
    %31 = vector.broadcast %30 : f32 to vector<1x1xf32>
    %32 = arith.addf %26, %31 : vector<1x1xf32>
    %c0_13 = arith.constant 0 : index
    %c0_14 = arith.constant 0 : index
    %33 = vector.load %arg5[%c0_13, %c0_14] : memref<1x1xf32, #tpu.memory_space<vmem>>, vector<1x1xf32>
    tpu.vector_store %arg5[%c0_13, %c0_14], %32 {strides = array<i32>} : memref<1x1xf32, #tpu.memory_space<vmem>>, vector<1x1xf32>,
    %c1_i32 = arith.constant 1 : i32
    %34 = arith.cmpi eq, %arg0, %c1_i32 : i32
    %35 = arith.extui %34 : i1 to i32
    %c0_i32_15 = arith.constant 0 : i32
    %36 = arith.cmpi ne, %35, %c0_i32_15 : i32
    scf.if %36 {
      %c0_16 = arith.constant 0 : index
      %c0_17 = arith.constant 0 : index
      %37 = vector.load %arg5[%c0_16, %c0_17] : memref<1x1xf32, #tpu.memory_space<vmem>>, vector<1x1xf32>
      %cst_18 = arith.constant 6.51041686E-4 : f32
      %38 = vector.broadcast %cst_18 : f32 to vector<1x1xf32>
      %39 = arith.mulf %37, %38 : vector<1x1xf32>
      %c0_19 = arith.constant 0 : index
      %c0_20 = arith.constant 0 : index
      %40 = vector.load %arg4[%c0_19, %c0_20] : memref<1x1xf32, #tpu.memory_space<vmem>>, vector<1x1xf32>
      tpu.vector_store %arg4[%c0_19, %c0_20], %39 {strides = array<i32>} : memref<1x1xf32, #tpu.memory_space<vmem>>, vector<1x1xf32>,
    } else {
    }
    return
  }
  func.func @transform_0(%arg0: i32) -> (i32, i32) {
    %c0_i32 = arith.constant 0 : i32
    %c0_i32_0 = arith.constant 0 : i32
    %c0_i32_1 = arith.constant 0 : i32
    return %c0_i32, %c0_i32_0 : i32, i32
  }
  func.func @transform_1(%arg0: i32) -> (i32, i32) {
    %c0_i32 = arith.constant 0 : i32
    %c0_i32_0 = arith.constant 0 : i32
    return %arg0, %c0_i32 : i32, i32
  }
  func.func @transform_2(%arg0: i32) -> (i32, i32) {
    %c0_i32 = arith.constant 0 : i32
    %c0_i32_0 = arith.constant 0 : i32
    return %arg0, %c0_i32 : i32, i32
  }
  func.func @transform_3(%arg0: i32) -> (i32, i32) {
    %c0_i32 = arith.constant 0 : i32
    %c0_i32_0 = arith.constant 0 : i32
    %c0_i32_1 = arith.constant 0 : i32
    return %c0_i32, %c0_i32_0 : i32, i32
  }
}

</mosaic_0001>

<llo_original>
// kernel: tpu_custom_call.1
$region0: #{tpu_custom_call.1}
  #allocation0 [shape = 'u32[]', space=smem, size = 0x4, offset = 0x4, fixed_abs, tag = 'smem constant byte address 0x4 - core index']
  #allocation1 [shape = 'u32[72,128]{1,0:T(1,128)}', space=vmem, size = 0x9000, scoped, tag = 'internal scratch']
  #allocation2 [shape = 'f32[1,1]{1,0:T(1,128)}', space=vmem, size = 0x200, scoped, tag = 'scratch operand']
  %s0 = inlined_call_operand.hbm [shape: f32[1,128], index: 0, kind: input, shape index: {}]
  %s1 = inlined_call_operand.hbm [shape: f32[16,128], index: 1, kind: input, shape index: {}]
  %s2 = inlined_call_operand.hbm [shape: f32[16,128], index: 2, kind: input, shape index: {}]
  %s3 = inlined_call_operand.hbm [shape: f32[1,1], index: 3, kind: output, shape index: {}]
  %s4 = sld [smem:[#allocation0]]
  $region65: #{tpu_custom_call.1} parent=0
    _
  %s6 = ssub.s32 1, %s4
  %s7 = scalar_select 0, %s6, %s4
  $region1: #{tpu_custom_call.1} parent=0
    #allocation3 [shape = 'u8[512]{0}', space=vmem, size = 0x400, scoped, tag = 'input window, operand 0, single buffered']
    #allocation4 [shape = 's32[2]{0}', space=sflag, size = 0x8, scoped, tag = 'scoped memory for tpu_custom_call.1']
    #allocation5 [shape = 's32[2]{0}', space=sflag, size = 0x8, scoped, tag = 'scoped memory for tpu_custom_call.1']
    #allocation6 [shape = 'u8[8192]{0}', space=vmem, size = 0x2000, scoped, tag = 'input window, operand 1']
    #allocation7 [shape = 's32[2]{0}', space=sflag, size = 0x8, scoped, tag = 'scoped memory for tpu_custom_call.1']
    #allocation8 [shape = 'u8[8192]{0}', space=vmem, size = 0x2000, scoped, tag = 'input window, operand 2']
    #allocation9 [shape = 'u8[512]{0}', space=vmem, size = 0x400, scoped, tag = 'output window, operand 0, single buffered']
    %8 = vsyncpa [#allocation4], 0
    %9 = vsyncpa [#allocation7], 0
    %s10 = scalar_lea.sflag [#allocation7], 1
    %11 = vsyncpa %s10, 0
    %12 = vsyncpa [#allocation5], 0
    loop: start=0, step=1, limit=4
    $region2: #{tpu_custom_call.1} parent=1 // loop_pre_header
      _
    $region3: #{tpu_custom_call.1} parent=1 // loop_header
      %s14 = sphi 0, %s18
      %p15 = scmp.ge.s32.totalorder %s14, 4
      %s22 = sphi 0, %s22
      %s24 = sphi 0, %s22
      %s25 = sphi 0, %s24
      %s39 = sphi 0, %s25
      %s45 = sphi 0, %s47
      %s48 = sphi 0, %s45
      %s49 = sphi 0, %s48
      %s65 = sphi 0, %s49
      %s71 = sphi 0, %s73
      %s74 = sphi 0, %s71
      %s75 = sphi 0, %s74
      %s91 = sphi 0, %s75
      %s95 = sphi 0, %s95
      %s97 = sphi 0, %s95
      %s98 = sphi 0, %s97
      %s112 = sphi 0, %s98
    $region4: #{tpu_custom_call.1} parent=1 // loop_header_branch
      %17 = sbr.rel (%p15) target = $region8
    $region5: #{tpu_custom_call.1} parent=1 // loop_body
      %s19 = ssub.s32 %s14, 1
      %s20 = ssub.s32 %s14, 2
      %s21 = sadd.s32 %s14, 1
      %s23 = sadd.s32 %s22, 1
      %p26 = scmp.eq.s32.totalorder %s14, 1
      %p27 = scmp.ne.s32.totalorder %s22, %s24
      %p28 = scmp.eq.s32.totalorder %s14, 0
      %p29 = por %p27, %p28
      %p30 = scmp.ne.s32.totalorder %s22, %s24
      %p31 = scmp.eq.s32.totalorder %s19, 1
      %p32 = por %p30, %p31
      %p33 = scmp.ne.s32.totalorder %s24, %s25
      %p34 = scmp.eq.s32.totalorder %s19, 0
      %p35 = por %p33, %p34
      %p36 = scmp.ne.s32.totalorder %s24, %s25
      %p37 = scmp.eq.s32.totalorder %s20, 1
      %p38 = por %p36, %p37
      %p40 = scmp.ne.s32.totalorder %s25, %s39
      %p41 = scmp.eq.s32.totalorder %s20, 0
      %p42 = por %p40, %p41
      %s43 = ssub.s32 %s14, %s21
      %p44 = scmp.eq.s32.totalorder %s43, 0
      %s46 = sadd.s32 %s45, 1
      %s47 = scalar_select %p44, %s45, %s46
      %p50 = pneg %p44
      %p51 = scmp.eq.s32.totalorder %s14, 1
      %p52 = por %p50, %p51
      %p53 = scmp.ne.s32.totalorder %s45, %s48
      %p54 = scmp.eq.s32.totalorder %s14, 0
      %p55 = por %p53, %p54
      %p56 = scmp.ne.s32.totalorder %s45, %s48
      %p57 = scmp.eq.s32.totalorder %s19, 1
      %p58 = por %p56, %p57
      %p59 = scmp.ne.s32.totalorder %s48, %s49
      %p60 = scmp.eq.s32.totalorder %s19, 0
      %p61 = por %p59, %p60
      %p62 = scmp.ne.s32.totalorder %s48, %s49
      %p63 = scmp.eq.s32.totalorder %s20, 1
      %p64 = por %p62, %p63
      %p66 = scmp.ne.s32.totalorder %s49, %s65
      %p67 = scmp.eq.s32.totalorder %s20, 0
      %p68 = por %p66, %p67
      %s69 = ssub.s32 %s14, %s21
      %p70 = scmp.eq.s32.totalorder %s69, 0
      %s72 = sadd.s32 %s71, 1
      %s73 = scalar_select %p70, %s71, %s72
      %p76 = pneg %p70
      %p77 = scmp.eq.s32.totalorder %s14, 1
      %p78 = por %p76, %p77
      %p79 = scmp.ne.s32.totalorder %s71, %s74
      %p80 = scmp.eq.s32.totalorder %s14, 0
      %p81 = por %p79, %p80
      %p82 = scmp.ne.s32.totalorder %s71, %s74
      %p83 = scmp.eq.s32.totalorder %s19, 1
      %p84 = por %p82, %p83
      %p85 = scmp.ne.s32.totalorder %s74, %s75
      %p86 = scmp.eq.s32.totalorder %s19, 0
      %p87 = por %p85, %p86
      %p88 = scmp.ne.s32.totalorder %s74, %s75
      %p89 = scmp.eq.s32.totalorder %s20, 1
      %p90 = por %p88, %p89
      %p92 = scmp.ne.s32.totalorder %s75, %s91
      %p93 = scmp.eq.s32.totalorder %s20, 0
      %p94 = por %p92, %p93
      %s96 = sadd.s32 %s95, 1
      %p99 = scmp.eq.s32.totalorder %s14, 1
      %p100 = scmp.ne.s32.totalorder %s95, %s97
      %p101 = scmp.eq.s32.totalorder %s14, 0
      %p102 = por %p100, %p101
      %p103 = scmp.ne.s32.totalorder %s95, %s97
      %p104 = scmp.eq.s32.totalorder %s19, 1
      %p105 = por %p103, %p104
      %p106 = scmp.ne.s32.totalorder %s97, %s98
      %p107 = scmp.eq.s32.totalorder %s19, 0
      %p108 = por %p106, %p107
      %p109 = scmp.ne.s32.totalorder %s97, %s98
      %p110 = scmp.eq.s32.totalorder %s20, 1
      %p111 = por %p109, %p110
      %p113 = scmp.ne.s32.totalorder %s98, %s112
      %p114 = scmp.eq.s32.totalorder %s20, 0
      %p115 = por %p113, %p114
      %p116 = scmp.le.s32.totalorder 1, %s14
      %p117 = scmp.lt.s32.totalorder %s14, 3
      %p118 = pnand %p116, %p117
      %p119 = pneg %p118
      // Predicated region
      $region9: #{tpu_custom_call.1} parent=5 // pred_check
        _
      $region10: #{tpu_custom_call.1} parent=5 // pred_check_branch
        %121 = sbr.rel (%p118) target = $region12
      $region11: #{tpu_custom_call.1} parent=5 // pred_region
        %s122 = ssub.s32 %s14, 1
        // Predicated region
        $region13: #{tpu_custom_call.1} parent=11 // pred_check
          %p123 = pneg %p35
        $region14: #{tpu_custom_call.1} parent=11 // pred_check_branch
          %125 = sbr.rel (%p123) target = $region16
        $region15: #{tpu_custom_call.1} parent=11 // pred_region
          %127 = vsyncadd [#allocation4], 0
          %s129 = sshll.u32 %s0, 4
          %s130 = int_to_ptr.hbm [resolvable:$true] %s129
          %s131 = sshll.u32 [#allocation3], 4
          %s132 = int_to_ptr.vmem [resolvable:$true] %s131
          %134 = dma.hbm_to_vmem [thread:$0]  %s130, 16, %s132, [#allocation4]
        $region16: #{tpu_custom_call.1} parent=11 // pred_fallthru
          _
      $region12: #{tpu_custom_call.1} parent=5 // pred_fallthru
        _
      %p135 = scmp.lt.s32.totalorder %s14, 2
      // Predicated region
      $region17: #{tpu_custom_call.1} parent=5 // pred_check
        %p136 = pneg %p135
      $region18: #{tpu_custom_call.1} parent=5 // pred_check_branch
        %138 = sbr.rel (%p136) target = $region20
      $region19: #{tpu_custom_call.1} parent=5 // pred_region
        // Predicated region
        $region21: #{tpu_custom_call.1} parent=19 // pred_check
          %p139 = pneg %p55
        $region22: #{tpu_custom_call.1} parent=19 // pred_check_branch
          %141 = sbr.rel (%p139) target = $region24
        $region23: #{tpu_custom_call.1} parent=19 // pred_region
          %s142 = sand.u32 %s14, 1
          %s143 = scalar_lea.sflag [#allocation7], %s142
          %s144 = sand.u32 %s45, 1
          %s145 = smul.addr %s144, 8
          %s146 = scalar_lea.vmem [#allocation6], %s145
          %148 = vsyncadd %s143, 0
          %s149 = smul.addr %s14, 8
          %s150 = scalar_lea.hbm %s1, %s149
          %s152 = sshll.u32 %s150, 4
          %s153 = int_to_ptr.hbm [resolvable:$true] %s152
          %s154 = sshll.u32 %s146, 4
          %s155 = int_to_ptr.vmem [resolvable:$true] %s154
          %157 = dma.hbm_to_vmem [thread:$0]  %s153, 128, %s155, %s143
        $region24: #{tpu_custom_call.1} parent=19 // pred_fallthru
          _
        // Predicated region
        $region25: #{tpu_custom_call.1} parent=19 // pred_check
          %p158 = pneg %p81
        $region26: #{tpu_custom_call.1} parent=19 // pred_check_branch
          %160 = sbr.rel (%p158) target = $region28
        $region27: #{tpu_custom_call.1} parent=19 // pred_region
          %s161 = sand.u32 %s14, 1
          %s162 = scalar_lea.sflag [#allocation7], %s161
          %s163 = sand.u32 %s71, 1
          %s164 = smul.addr %s163, 8
          %s165 = scalar_lea.vmem [#allocation8], %s164
          %167 = vsyncadd %s162, 0
          %s168 = smul.addr %s14, 8
          %s169 = scalar_lea.hbm %s2, %s168
          %s171 = sshll.u32 %s169, 4
          %s172 = int_to_ptr.hbm [resolvable:$true] %s171
          %s173 = sshll.u32 %s165, 4
          %s174 = int_to_ptr.vmem [resolvable:$true] %s173
          %176 = dma.hbm_to_vmem [thread:$0]  %s172, 128, %s174, %s162
        $region28: #{tpu_custom_call.1} parent=19 // pred_fallthru
          _
      $region20: #{tpu_custom_call.1} parent=5 // pred_fallthru
        _
      %p177 = scmp.le.s32.totalorder 1, %s14
      %p178 = scmp.lt.s32.totalorder %s14, 3
      %p179 = pnand %p177, %p178
      %p180 = pneg %p179
      // Predicated region
      $region29: #{tpu_custom_call.1} parent=5 // pred_check
        _
      $region30: #{tpu_custom_call.1} parent=5 // pred_check_branch
        %182 = sbr.rel (%p179) target = $region32
      $region31: #{tpu_custom_call.1} parent=5 // pred_region
        %s183 = ssub.s32 %s14, 1
        // Predicated region
        $region33: #{tpu_custom_call.1} parent=31 // pred_check
          %p184 = pneg %p35
        $region34: #{tpu_custom_call.1} parent=31 // pred_check_branch
          %186 = sbr.rel (%p184) target = $region36
        $region35: #{tpu_custom_call.1} parent=31 // pred_region
          %188 = dma.done [#allocation4], 16
        $region36: #{tpu_custom_call.1} parent=31 // pred_fallthru
          _
        %s189 = sand.u32 %s19, 1
        %s190 = scalar_lea.sflag [#allocation7], %s189
        %s191 = sand.u32 %s48, 1
        %s192 = smul.addr %s191, 8
        %s193 = scalar_lea.vmem [#allocation6], %s192
        // Predicated region
        $region37: #{tpu_custom_call.1} parent=31 // pred_check
          %p194 = pneg %p61
        $region38: #{tpu_custom_call.1} parent=31 // pred_check_branch
          %196 = sbr.rel (%p194) target = $region40
        $region39: #{tpu_custom_call.1} parent=31 // pred_region
          %198 = dma.done %s190, 128
        $region40: #{tpu_custom_call.1} parent=31 // pred_fallthru
          _
        %s199 = sand.u32 %s19, 1
        %s200 = scalar_lea.sflag [#allocation7], %s199
        %s201 = sand.u32 %s74, 1
        %s202 = smul.addr %s201, 8
        %s203 = scalar_lea.vmem [#allocation8], %s202
        // Predicated region
        $region41: #{tpu_custom_call.1} parent=31 // pred_check
          %p204 = pneg %p87
        $region42: #{tpu_custom_call.1} parent=31 // pred_check_branch
          %206 = sbr.rel (%p204) target = $region44
        $region43: #{tpu_custom_call.1} parent=31 // pred_region
          %208 = dma.done %s200, 128
        $region44: #{tpu_custom_call.1} parent=31 // pred_fallthru
          _
        %p209 = pneg %p35
        %p210 = pneg %p32
        %s211 = sand.u32 %s19, 1
        %s212 = scalar_lea.sflag [#allocation7], %s211
        %s213 = sand.u32 %s48, 1
        %s214 = smul.addr %s213, 8
        %s215 = scalar_lea.vmem [#allocation6], %s214
        %p216 = pneg %p61
        %p217 = pneg %p58
        %s218 = sand.u32 %s19, 1
        %s219 = scalar_lea.sflag [#allocation7], %s218
        %s220 = sand.u32 %s74, 1
        %s221 = smul.addr %s220, 8
        %s222 = scalar_lea.vmem [#allocation8], %s221
        %p223 = pneg %p87
        %p224 = pneg %p84
        %p225 = pneg %p108
        %p226 = pneg %p105
        %p227 = scmp.eq.s32.totalorder %s19, 0
        // Predicated region
        $region45: #{tpu_custom_call.1} parent=31 // pred_check
          %p228 = pneg %p227
        $region46: #{tpu_custom_call.1} parent=31 // pred_check_branch
          %230 = sbr.rel (%p228) target = $region48
        $region47: #{tpu_custom_call.1} parent=31 // pred_region
          %vm231 = vcmask 0
          %232 = vst.msk [vmem:[#allocation2] sm:$0x1] %vm231, 0.0
        $region48: #{tpu_custom_call.1} parent=31 // pred_fallthru
          _
        %v233 = vld [vmem:[%s193] sm:$0xff]
        %v234 = vld [vmem:[%s203] sm:$0xff]
        %v235 = vld [vmem:[#allocation3] sm:$0x1]
        %v236 = vxor.u32 %v233, 2147483648
        %v237 = vmul.f32 %v236, 1.442695
        %v238 = vpow.pop %v237
        %v239 = vadd.f32 %v238, 1.0
        %v240 = vrcp.pop %v239
        %v241 = vmul.f32 %v239, %v240
        %v242 = vsub.f32 1.0, %v241
        %v243 = vmul.f32 %v240, %v242
        %v244 = vadd.f32 %v240, %v243
        %vm245 = vweird.f32 %v239
        %vm246 = vweird.f32 %v240
        %vm247 = vmor %vm245, %vm246
        %v248 = vsel %vm247, %v240, %v244
        %v249 = vand.u32 2147483647, %v239
        %vm250 = vcmp.eq.f32.partialorder %v249, 8.507059e+37
        %v251 = vand.u32 %v239, 2147483648
        %v252 = vor.u32 1.1754944e-38, %v251
        %v253 = vsel %vm250, %v252, %v248
        %v254 = vmul.f32 1.0, %v253
        %v256 = vperm.slane %v235, 0
        %v258 = vmul.f32 %v256, %v234
        %v259 = vlog2.pop %v254
        %v260 = vmul.f32 %v259, 0.6931472
        %v261 = vsub.f32 0.0, %v260
        %v262 = vmul.f32 %v258, %v261
        %v263 = vsub.f32 1.0, %v234
        %v264 = vsub.f32 1.0, %v254
        %v265 = vlog2.pop %v264
        %v266 = vmul.f32 %v265, 0.6931472
        %v267 = vsub.f32 0.0, %v266
        %v268 = vmul.f32 %v263, %v267
        %v269 = vadd.f32 %v262, %v268
        %v270 = vld [vmem:[#allocation2] sm:$0x1]
        %271 = vadd.xlane.f32.xlu0 %v269
        %v272 = vpop.xlane.xlu0 %271
        %v273 = vrot.slane %v272, 4
        %v274 = vadd.f32 %v272, %v273
        %v275 = vrot.slane %v274, 2
        %v276 = vadd.f32 %v274, %v275
        %v277 = vrot.slane %v276, 1
        %v278 = vadd.f32 %v276, %v277
        %s279 = vtos %v278
        %v280 = vstv %s279
        %v281 = vadd.f32 %v270, %v280
        %vm282 = vcmask 0
        %283 = vst.msk [vmem:[#allocation2] sm:$0x1] %vm282, %v281
        %p284 = scmp.eq.s32.totalorder %s19, 1
        // Predicated region
        $region49: #{tpu_custom_call.1} parent=31 // pred_check
          %p285 = pneg %p284
        $region50: #{tpu_custom_call.1} parent=31 // pred_check_branch
          %287 = sbr.rel (%p285) target = $region52
        $region51: #{tpu_custom_call.1} parent=31 // pred_region
          %v288 = vld [vmem:[#allocation2] sm:$0x1]
          %v289 = vmul.f32 %v288, 0.0006510417
          %290 = vst.msk [vmem:[#allocation9] sm:$0x1] %vm282, %v289
        $region52: #{tpu_custom_call.1} parent=31 // pred_fallthru
          _
        // Predicated region
        $region53: #{tpu_custom_call.1} parent=31 // pred_check
          %p291 = pneg %p105
        $region54: #{tpu_custom_call.1} parent=31 // pred_check_branch
          %293 = sbr.rel (%p291) target = $region56
        $region55: #{tpu_custom_call.1} parent=31 // pred_region
          %295 = vsyncadd [#allocation5], 0
          %s297 = sshll.u32 [#allocation9], 4
          %s298 = int_to_ptr.vmem [resolvable:$true] %s297
          %s299 = sshll.u32 %s3, 4
          %s300 = int_to_ptr.hbm [resolvable:$true] %s299
          %302 = dma.vmem_to_hbm [thread:$0]  %s298, 16, %s300, [#allocation5]
        $region56: #{tpu_custom_call.1} parent=31 // pred_fallthru
          _
        // Predicated region
        $region57: #{tpu_custom_call.1} parent=31 // pred_check
          %p303 = pneg %p105
        $region58: #{tpu_custom_call.1} parent=31 // pred_check_branch
          %305 = sbr.rel (%p303) target = $region60
        $region59: #{tpu_custom_call.1} parent=31 // pred_region
          %307 = dma.done [#allocation5], 16
        $region60: #{tpu_custom_call.1} parent=31 // pred_fallthru
          _
      $region32: #{tpu_custom_call.1} parent=5 // pred_fallthru
        _
      %p308 = scmp.le.s32.totalorder 2, %s14
      // Predicated region
      $region61: #{tpu_custom_call.1} parent=5 // pred_check
        %p309 = pneg %p308
      $region62: #{tpu_custom_call.1} parent=5 // pred_check_branch
        %311 = sbr.rel (%p309) target = $region64
      $region63: #{tpu_custom_call.1} parent=5 // pred_region
        %s312 = ssub.s32 %s14, 2
      $region64: #{tpu_custom_call.1} parent=5 // pred_fallthru
        _
    $region6: #{tpu_custom_call.1} parent=1 // loop_footer
      %s18 = sadd.s32 1, %s14
    $region7: #{tpu_custom_call.1} parent=1 // loop_footer_branch
      %13 = sbr.rel target = $region3
    $region8: #{tpu_custom_call.1} parent=1 // loop_exit
      _
    %313 = vsyncpa [#allocation4], 1
    %s314 = scalar_lea.sflag [#allocation4], 1
    %315 = vsyncpa %s314, 1
    %316 = vsyncpa [#allocation7], 1
    %s317 = scalar_lea.sflag [#allocation7], 1
    %318 = vsyncpa %s317, 1
    %319 = vsyncpa [#allocation5], 1
    %s320 = scalar_lea.sflag [#allocation5], 1
    %321 = vsyncpa %s320, 1

</llo_original>
